<compile_context>
chip_gen: v7x
topology: tpu7x:2x2x1
jax: 0.10.0
libtpu: 0.0.40
codegen_flags: <defaults>
</compile_context>

<pallas_src>
import functools

import jax
import jax.numpy as jnp
from jax import lax
from jax.experimental import pallas as pl
from jax.experimental.pallas import tpu as pltpu


def _round_up(x, m):
    return (x + m - 1) // m * m


def cnn_kernel(*refs, kernel_sizes, f_pad, out_pad, seq_len):
    """Conv1d (all kernel sizes) + global max-pool + bias/ReLU + FC for one tile.

    refs = (emb, w_0, b_0, ..., w_{n-1}, b_{n-1}, fc_w, fc_b, out)
      emb : (TB, L_pad, E_pad)      bf16  (gathered embeddings, zero padded)
      w_j : (E_pad, k_j * f_pad)    bf16  (taps stacked along lanes, zero padded)
      b_j : (1, f_pad)              f32
      fc_w: (n, f_pad, out_pad)     f32   (per-branch FC weight, zero padded)
      fc_b: (1, out_pad)            f32
      out : (TB, out_pad)           f32
    """
    n = len(kernel_sizes)
    emb_ref = refs[0]
    fcw_ref = refs[1 + 2 * n]
    fcb_ref = refs[2 + 2 * n]
    out_ref = refs[3 + 2 * n]

    emb = emb_ref[...]                               # (TB, L_pad, E_pad) bf16
    TB, L_pad, E_pad = emb.shape
    R = TB * L_pad
    emb2 = emb.reshape(R, E_pad)                     # layout no-op (L_pad % 8 == 0)
    fcw = fcw_ref[...]                               # (n, f_pad, out_pad) f32

    # Position-in-sequence iota (full lane width -> only leading-dim broadcast).
    pos = lax.broadcasted_iota(jnp.int32, (1, L_pad, f_pad), 1)

    logits = jnp.zeros((TB, out_pad), jnp.float32)
    for j, k in enumerate(kernel_sizes):             # static unroll over branches
        w = refs[1 + 2 * j][...]                     # (E_pad, k*f_pad) bf16
        b = refs[2 + 2 * j][...]                     # (1, f_pad)       f32

        # One wide MXU matmul for the whole branch (all taps at once).
        z = jnp.dot(emb2, w, preferred_element_type=jnp.float32)   # (R, k*f_pad) f32

        # Align tap t with position p via a sublane rotation (XLU) of the
        # lane-tile-aligned slice; wrap-around rows fall past L_out and are
        # masked with -inf before the pool.
        acc = z[:, :f_pad]
        for t in range(1, k):                        # static unroll over taps
            zt = z[:, t * f_pad:(t + 1) * f_pad]     # aligned lane slice (free)
            acc = acc + pltpu.roll(zt, (R - t) % R, 0)

        acc3 = acc.reshape(TB, L_pad, f_pad)         # layout no-op
        l_out = seq_len - k + 1
        masked = jnp.where(pos < l_out, acc3, -jnp.inf)
        pooled = jnp.max(masked, axis=1)             # (TB, f_pad)

        # bias + ReLU after the pool (constant shift preserves the max; relu is
        # monotone) -> L_out x less VPU elementwise work.
        act = jnp.maximum(pooled + b, 0.0)

        logits = logits + jnp.dot(act, fcw[j], preferred_element_type=jnp.float32)

    out_ref[...] = logits + fcb_ref[...]


def _vmem_estimate(tb, l_pad, e_pad, kernel_sizes, f_pad, out_pad):
    emb = 2 * tb * l_pad * e_pad * 2                          # double-buffered bf16 input
    kmax = max(kernel_sizes)
    inter = tb * l_pad * (kmax + 1) * f_pad * 4               # widest z slab + acc (f32)
    w = sum(e_pad * k * f_pad * 2 + f_pad * 4 for k in kernel_sizes)
    fc = len(kernel_sizes) * f_pad * out_pad * 4 + out_pad * 4
    out = 2 * tb * out_pad * 4
    return emb + inter + w + fc + out


def _pick_batch_tile(batch, l_pad, e_pad, kernel_sizes, f_pad, out_pad):
    """Multiple-of-8 tile dividing B, preferring >=4 grid steps (pipelining and
    both v7x TensorCores) with a footprint that fits every generation's VMEM."""
    if batch <= 8 or batch % 8 != 0:
        return batch
    budget = 32 * 1024 * 1024
    cands = [tb for tb in (256, 128, 64, 32, 16, 8)
             if tb <= batch and batch % tb == 0]
    for min_steps in (4, 2, 1):
        for tb in cands:
            if (batch // tb >= min_steps and
                    _vmem_estimate(tb, l_pad, e_pad, kernel_sizes, f_pad, out_pad) <= budget):
                return tb
    return cands[-1] if cands else batch


def cnn_classifier_forward(input_ids, embedding_matrix, conv_ws, conv_bs,
                           fc_w, fc_b, kernel_sizes=(3, 4, 5)):
    kernel_sizes = tuple(kernel_sizes)
    B, L = input_ids.shape
    E = embedding_matrix.shape[1]
    F = conv_ws[0].shape[-1]
    num_classes = fc_w.shape[-1]
    if L < max(kernel_sizes):
        raise ValueError(f"seq_len {L} < max kernel size {max(kernel_sizes)}")

    f_pad = _round_up(max(F, 1), 128)        # lane-dense conv out channels
    out_pad = _round_up(max(num_classes, 1), 128)   # lane-dense logits store
    e_pad = _round_up(E, 8)
    l_pad = _round_up(L, 8)

    # Embedding lookup (gather) is glue; done in plain JAX, padded so in-kernel
    # reshapes are layout no-ops.
    # TODO(synk): fuse the gather into the kernel (scalar-prefetch ids + manual
    # DMA row gather from a pl.ANY HBM table) to cut the emb HBM round trip.
    table = embedding_matrix.astype(jnp.float32)
    if e_pad != E:
        table = jnp.pad(table, ((0, 0), (0, e_pad - E)))
    emb = jnp.take(table, input_ids, axis=0).astype(jnp.bfloat16)   # (B, L, e_pad)
    if l_pad != L:
        emb = jnp.pad(emb, ((0, 0), (0, l_pad - L), (0, 0)))

    # Pack conv weights: taps stacked along the (128-padded) lane dim per branch.
    conv_w_packed, conv_b_packed = [], []
    for w, b, k in zip(conv_ws, conv_bs, kernel_sizes):
        wp = jnp.zeros((e_pad, k * f_pad), jnp.float32)
        for t in range(k):
            wp = wp.at[:E, t * f_pad:t * f_pad + F].set(w[t].astype(jnp.float32))
        conv_w_packed.append(wp.astype(jnp.bfloat16))
        bp = jnp.zeros((1, f_pad), jnp.float32).at[0, :F].set(b.astype(jnp.float32))
        conv_b_packed.append(bp)

    # FC weight as (n_branches, f_pad, out_pad): per-branch leading-axis index.
    n = len(kernel_sizes)
    fcw = jnp.zeros((n, f_pad, out_pad), jnp.float32)
    for j in range(n):
        fcw = fcw.at[j, :F, :num_classes].set(fc_w[j * F:(j + 1) * F].astype(jnp.float32))
    fcb = jnp.zeros((1, out_pad), jnp.float32).at[0, :num_classes].set(
        fc_b.astype(jnp.float32))

    TB = _pick_batch_tile(B, l_pad, e_pad, kernel_sizes, f_pad, out_pad)
    grid = (B // TB,)

    inputs = [emb]
    in_specs = [pl.BlockSpec((TB, l_pad, e_pad), lambda i: (i, 0, 0))]
    for wp, bp in zip(conv_w_packed, conv_b_packed):
        inputs += [wp, bp]
        in_specs += [pl.BlockSpec(wp.shape, lambda i: (0, 0)),
                     pl.BlockSpec((1, f_pad), lambda i: (0, 0))]
    inputs += [fcw, fcb]
    in_specs += [pl.BlockSpec(fcw.shape, lambda i: (0, 0, 0)),
                 pl.BlockSpec((1, out_pad), lambda i: (0, 0))]

    vmem_limit = min(56 * 1024 * 1024,
                     max(32 * 1024 * 1024,
                         2 * _vmem_estimate(TB, l_pad, e_pad, kernel_sizes,
                                            f_pad, out_pad)))

    kernel = functools.partial(cnn_kernel, kernel_sizes=kernel_sizes,
                               f_pad=f_pad, out_pad=out_pad, seq_len=L)
    out_padded = pl.pallas_call(
        kernel,
        out_shape=jax.ShapeDtypeStruct((B, out_pad), jnp.float32),
        grid=grid,
        in_specs=in_specs,
        out_specs=pl.BlockSpec((TB, out_pad), lambda i: (i, 0)),
        compiler_params=pltpu.CompilerParams(
            dimension_semantics=("parallel",),
            vmem_limit_bytes=vmem_limit),
    )(*inputs)
    return out_padded[:, :num_classes]


def reference_forward(input_ids, embedding_matrix, conv_ws, conv_bs,
                      fc_w, fc_b, kernel_sizes=(3, 4, 5)):
    """Pure-JAX reference mirroring the PyTorch forward.

    Matmul operands are bf16-quantized (then computed in f32) to match the
    kernel's mixed precision up to accumulation order.
    """
    emb = embedding_matrix[input_ids].astype(jnp.bfloat16).astype(jnp.float32)
    L = emb.shape[1]
    pooled = []
    for w, b, k in zip(conv_ws, conv_bs, kernel_sizes):
        wq = w.astype(jnp.bfloat16).astype(jnp.float32)
        L_out = L - k + 1
        s = sum(jnp.einsum('ble,ef->blf', emb[:, t:t + L_out, :], wq[t],
                           precision=jax.lax.Precision.HIGHEST)
                for t in range(k))
        s = jax.nn.relu(s + b[None, None, :])
        pooled.append(jnp.max(s, axis=1))
    concat = jnp.concatenate(pooled, axis=-1)
    return jnp.dot(concat, fc_w, precision=jax.lax.Precision.HIGHEST) + fc_b[None, :]


if __name__ == "__main__":
    # Small, deterministic synthetic config.
    vocab_size, embedding_dim = 32, 16
    num_filters = 8
    kernel_sizes = (3, 4, 5)
    batch, seq_len = 2, 8

    key = jax.random.PRNGKey(0)
    keys = jax.random.split(key, 10)

    embedding_matrix = jax.random.normal(keys[0], (vocab_size, embedding_dim),
                                         dtype=jnp.float32)
    # Conv1d weights: PyTorch shape (F, E, k) stored here as (k, E, F).
    conv_ws = [0.1 * jax.random.normal(keys[1 + i], (k, embedding_dim, num_filters),
                                       dtype=jnp.float32)
               for i, k in enumerate(kernel_sizes)]
    conv_bs = [0.1 * jax.random.normal(keys[4 + i], (num_filters,), dtype=jnp.float32)
               for i in range(len(kernel_sizes))]
    fc_w = 0.1 * jax.random.normal(keys[7], (num_filters * len(kernel_sizes), 1),
                                   dtype=jnp.float32)
    fc_b = 0.1 * jax.random.normal(keys[8], (1,), dtype=jnp.float32)
    input_ids = jax.random.randint(keys[9], (batch, seq_len), 0, vocab_size)

    logits = cnn_classifier_forward(input_ids, embedding_matrix, conv_ws, conv_bs,
                                    fc_w, fc_b, kernel_sizes)
    logits = jax.block_until_ready(logits)

    ref = reference_forward(input_ids, embedding_matrix, conv_ws, conv_bs,
                            fc_w, fc_b, kernel_sizes)
    assert logits.shape == (batch, 1), logits.shape
    assert jnp.allclose(logits, ref, atol=2e-3, rtol=2e-3), (logits, ref)

    print("KERNEL_OK")
</pallas_src>

<mosaic_0001>
module attributes {stable_mosaic.version = 11 : i64} {
  func.func @cnn_kernel(%arg0: i32, %arg1: memref<2x8x16xbf16, #tpu.memory_space<vmem>>, %arg2: memref<16x384xbf16, #tpu.memory_space<vmem>>, %arg3: memref<1x128xf32, #tpu.memory_space<vmem>>, %arg4: memref<16x512xbf16, #tpu.memory_space<vmem>>, %arg5: memref<1x128xf32, #tpu.memory_space<vmem>>, %arg6: memref<16x640xbf16, #tpu.memory_space<vmem>>, %arg7: memref<1x128xf32, #tpu.memory_space<vmem>>, %arg8: memref<3x128x128xf32, #tpu.memory_space<vmem>>, %arg9: memref<1x128xf32, #tpu.memory_space<vmem>>, %arg10: memref<2x128xf32, #tpu.memory_space<vmem>>) attributes {dimension_semantics = [#tpu.dimension_semantics<parallel>], iteration_bounds = array<i64: 1>, scalar_prefetch = 0 : i64, scratch_operands = 0 : i64, tpu.core_type = #tpu.core_type<tc>, window_params = [{transform_indices = @transform_0, window_bounds = array<i64: 2, 8, 16>}, {pipeline_mode = #tpu.pipeline_mode<synchronous>, transform_indices = @transform_1, window_bounds = array<i64: 16, 384>}, {pipeline_mode = #tpu.pipeline_mode<synchronous>, transform_indices = @transform_2, window_bounds = array<i64: 1, 128>}, {pipeline_mode = #tpu.pipeline_mode<synchronous>, transform_indices = @transform_3, window_bounds = array<i64: 16, 512>}, {pipeline_mode = #tpu.pipeline_mode<synchronous>, transform_indices = @transform_4, window_bounds = array<i64: 1, 128>}, {pipeline_mode = #tpu.pipeline_mode<synchronous>, transform_indices = @transform_5, window_bounds = array<i64: 16, 640>}, {pipeline_mode = #tpu.pipeline_mode<synchronous>, transform_indices = @transform_6, window_bounds = array<i64: 1, 128>}, {pipeline_mode = #tpu.pipeline_mode<synchronous>, transform_indices = @transform_7, window_bounds = array<i64: 3, 128, 128>}, {pipeline_mode = #tpu.pipeline_mode<synchronous>, transform_indices = @transform_8, window_bounds = array<i64: 1, 128>}, {transform_indices = @transform_9, window_bounds = array<i64: 2, 128>}]} {
    %c0 = arith.constant 0 : index
    %c0_0 = arith.constant 0 : index
    %c0_1 = arith.constant 0 : index
    %0 = vector.load %arg1[%c0, %c0_0, %c0_1] : memref<2x8x16xbf16, #tpu.memory_space<vmem>>, vector<2x8x16xbf16>
    %1 = vector.shape_cast %0 : vector<2x8x16xbf16> to vector<16x16xbf16>
    %c0_2 = arith.constant 0 : index
    %c0_3 = arith.constant 0 : index
    %c0_4 = arith.constant 0 : index
    %2 = vector.load %arg8[%c0_2, %c0_3, %c0_4] : memref<3x128x128xf32, #tpu.memory_space<vmem>>, vector<3x128x128xf32>
    %3 = tpu.iota {dimensions = array<i32: 1>} : vector<1x8x128xi32>
    %cst = arith.constant 0.000000e+00 : f32
    %4 = vector.broadcast %cst : f32 to vector<2x128xf32>
    %c0_5 = arith.constant 0 : index
    %c0_6 = arith.constant 0 : index
    %5 = vector.load %arg2[%c0_5, %c0_6] : memref<16x384xbf16, #tpu.memory_space<vmem>>, vector<16x384xbf16>
    %c0_7 = arith.constant 0 : index
    %c0_8 = arith.constant 0 : index
    %6 = vector.load %arg3[%c0_7, %c0_8] : memref<1x128xf32, #tpu.memory_space<vmem>>, vector<1x128xf32>
    %cst_9 = arith.constant dense<0.000000e+00> : vector<16x384xf32>
    %7 = tpu.matmul %1, %5, %cst_9 {dimension_numbers = #tpu.dot_dimension_numbers<[1], [0], [0], [1], [0, 0, 1, 1], [], []>} : vector<16x16xbf16>, vector<16x384xbf16>, vector<16x384xf32> -> vector<16x384xf32>
    %8 = vector.extract_strided_slice %7 {offsets = [0, 0], sizes = [16, 128], strides = [1, 1]} : vector<16x384xf32> to vector<16x128xf32>
    %9 = vector.extract_strided_slice %7 {offsets = [0, 128], sizes = [16, 128], strides = [1, 1]} : vector<16x384xf32> to vector<16x128xf32>
    %c15_i32 = arith.constant 15 : i32
    %10 = tpu.dynamic_rotate %9 by %c15_i32 dim 0 : vector<16x128xf32>, i32 -> vector<16x128xf32>
    %11 = arith.addf %8, %10 : vector<16x128xf32>
    %12 = vector.extract_strided_slice %7 {offsets = [0, 256], sizes = [16, 128], strides = [1, 1]} : vector<16x384xf32> to vector<16x128xf32>
    %c14_i32 = arith.constant 14 : i32
    %13 = tpu.dynamic_rotate %12 by %c14_i32 dim 0 : vector<16x128xf32>, i32 -> vector<16x128xf32>
    %14 = arith.addf %11, %13 : vector<16x128xf32>
    %15 = vector.shape_cast %14 : vector<16x128xf32> to vector<2x8x128xf32>
    %c6_i32 = arith.constant 6 : i32
    %16 = vector.broadcast %c6_i32 : i32 to vector<1x8x128xi32>
    %17 = arith.cmpi slt, %3, %16 : vector<1x8x128xi32>
    %cst_10 = arith.constant 0xFF800000 : f32
    %18 = vector.shape_cast %17 : vector<1x8x128xi1> to vector<1x8x128xi1>
    %19 = vector.broadcast %18 : vector<1x8x128xi1> to vector<2x8x128xi1>
    %20 = vector.broadcast %cst_10 : f32 to vector<2x8x128xf32>
    %21 = arith.select %19, %15, %20 : vector<2x8x128xi1>, vector<2x8x128xf32>
    %cst_11 = arith.constant dense<0xFF800000> : vector<2x128xf32>
    %22 = vector.multi_reduction <maximumf>, %21, %cst_11 [1] : vector<2x8x128xf32> to vector<2x128xf32>
    %23 = vector.broadcast %6 : vector<1x128xf32> to vector<2x128xf32>
    %24 = arith.addf %22, %23 : vector<2x128xf32>
    %cst_12 = arith.constant 0.000000e+00 : f32
    %25 = vector.broadcast %cst_12 : f32 to vector<2x128xf32>
    %26 = arith.maximumf %24, %25 : vector<2x128xf32>
    %27 = vector.extract_strided_slice %2 {offsets = [0, 0, 0], sizes = [1, 128, 128], strides = [1, 1, 1]} : vector<3x128x128xf32> to vector<1x128x128xf32>
    %28 = vector.shape_cast %27 : vector<1x128x128xf32> to vector<128x128xf32>
    %cst_13 = arith.constant dense<0.000000e+00> : vector<2x128xf32>
    %29 = tpu.matmul %26, %28, %cst_13 {dimension_numbers = #tpu.dot_dimension_numbers<[1], [0], [0], [1], [0, 0, 1, 1], [], []>} : vector<2x128xf32>, vector<128x128xf32>, vector<2x128xf32> -> vector<2x128xf32>
    %30 = arith.addf %4, %29 : vector<2x128xf32>
    %c0_14 = arith.constant 0 : index
    %c0_15 = arith.constant 0 : index
    %31 = vector.load %arg4[%c0_14, %c0_15] : memref<16x512xbf16, #tpu.memory_space<vmem>>, vector<16x512xbf16>
    %c0_16 = arith.constant 0 : index
    %c0_17 = arith.constant 0 : index
    %32 = vector.load %arg5[%c0_16, %c0_17] : memref<1x128xf32, #tpu.memory_space<vmem>>, vector<1x128xf32>
    %cst_18 = arith.constant dense<0.000000e+00> : vector<16x512xf32>
    %33 = tpu.matmul %1, %31, %cst_18 {dimension_numbers = #tpu.dot_dimension_numbers<[1], [0], [0], [1], [0, 0, 1, 1], [], []>} : vector<16x16xbf16>, vector<16x512xbf16>, vector<16x512xf32> -> vector<16x512xf32>
    %34 = vector.extract_strided_slice %33 {offsets = [0, 0], sizes = [16, 128], strides = [1, 1]} : vector<16x512xf32> to vector<16x128xf32>
    %35 = vector.extract_strided_slice %33 {offsets = [0, 128], sizes = [16, 128], strides = [1, 1]} : vector<16x512xf32> to vector<16x128xf32>
    %c15_i32_19 = arith.constant 15 : i32
    %36 = tpu.dynamic_rotate %35 by %c15_i32_19 dim 0 : vector<16x128xf32>, i32 -> vector<16x128xf32>
    %37 = arith.addf %34, %36 : vector<16x128xf32>
    %38 = vector.extract_strided_slice %33 {offsets = [0, 256], sizes = [16, 128], strides = [1, 1]} : vector<16x512xf32> to vector<16x128xf32>
    %c14_i32_20 = arith.constant 14 : i32
    %39 = tpu.dynamic_rotate %38 by %c14_i32_20 dim 0 : vector<16x128xf32>, i32 -> vector<16x128xf32>
    %40 = arith.addf %37, %39 : vector<16x128xf32>
    %41 = vector.extract_strided_slice %33 {offsets = [0, 384], sizes = [16, 128], strides = [1, 1]} : vector<16x512xf32> to vector<16x128xf32>
    %c13_i32 = arith.constant 13 : i32
    %42 = tpu.dynamic_rotate %41 by %c13_i32 dim 0 : vector<16x128xf32>, i32 -> vector<16x128xf32>
    %43 = arith.addf %40, %42 : vector<16x128xf32>
    %44 = vector.shape_cast %43 : vector<16x128xf32> to vector<2x8x128xf32>
    %c5_i32 = arith.constant 5 : i32
    %45 = vector.broadcast %c5_i32 : i32 to vector<1x8x128xi32>
    %46 = arith.cmpi slt, %3, %45 : vector<1x8x128xi32>
    %cst_21 = arith.constant 0xFF800000 : f32
    %47 = vector.shape_cast %46 : vector<1x8x128xi1> to vector<1x8x128xi1>
    %48 = vector.broadcast %47 : vector<1x8x128xi1> to vector<2x8x128xi1>
    %49 = vector.broadcast %cst_21 : f32 to vector<2x8x128xf32>
    %50 = arith.select %48, %44, %49 : vector<2x8x128xi1>, vector<2x8x128xf32>
    %cst_22 = arith.constant dense<0xFF800000> : vector<2x128xf32>
    %51 = vector.multi_reduction <maximumf>, %50, %cst_22 [1] : vector<2x8x128xf32> to vector<2x128xf32>
    %52 = vector.broadcast %32 : vector<1x128xf32> to vector<2x128xf32>
    %53 = arith.addf %51, %52 : vector<2x128xf32>
    %cst_23 = arith.constant 0.000000e+00 : f32
    %54 = vector.broadcast %cst_23 : f32 to vector<2x128xf32>
    %55 = arith.maximumf %53, %54 : vector<2x128xf32>
    %56 = vector.extract_strided_slice %2 {offsets = [1, 0, 0], sizes = [1, 128, 128], strides = [1, 1, 1]} : vector<3x128x128xf32> to vector<1x128x128xf32>
    %57 = vector.shape_cast %56 : vector<1x128x128xf32> to vector<128x128xf32>
    %cst_24 = arith.constant dense<0.000000e+00> : vector<2x128xf32>
    %58 = tpu.matmul %55, %57, %cst_24 {dimension_numbers = #tpu.dot_dimension_numbers<[1], [0], [0], [1], [0, 0, 1, 1], [], []>} : vector<2x128xf32>, vector<128x128xf32>, vector<2x128xf32> -> vector<2x128xf32>
    %59 = arith.addf %30, %58 : vector<2x128xf32>
    %c0_25 = arith.constant 0 : index
    %c0_26 = arith.constant 0 : index
    %60 = vector.load %arg6[%c0_25, %c0_26] : memref<16x640xbf16, #tpu.memory_space<vmem>>, vector<16x640xbf16>
    %c0_27 = arith.constant 0 : index
    %c0_28 = arith.constant 0 : index
    %61 = vector.load %arg7[%c0_27, %c0_28] : memref<1x128xf32, #tpu.memory_space<vmem>>, vector<1x128xf32>
    %cst_29 = arith.constant dense<0.000000e+00> : vector<16x640xf32>
    %62 = tpu.matmul %1, %60, %cst_29 {dimension_numbers = #tpu.dot_dimension_numbers<[1], [0], [0], [1], [0, 0, 1, 1], [], []>} : vector<16x16xbf16>, vector<16x640xbf16>, vector<16x640xf32> -> vector<16x640xf32>
    %63 = vector.extract_strided_slice %62 {offsets = [0, 0], sizes = [16, 128], strides = [1, 1]} : vector<16x640xf32> to vector<16x128xf32>
    %64 = vector.extract_strided_slice %62 {offsets = [0, 128], sizes = [16, 128], strides = [1, 1]} : vector<16x640xf32> to vector<16x128xf32>
    %c15_i32_30 = arith.constant 15 : i32
    %65 = tpu.dynamic_rotate %64 by %c15_i32_30 dim 0 : vector<16x128xf32>, i32 -> vector<16x128xf32>
    %66 = arith.addf %63, %65 : vector<16x128xf32>
    %67 = vector.extract_strided_slice %62 {offsets = [0, 256], sizes = [16, 128], strides = [1, 1]} : vector<16x640xf32> to vector<16x128xf32>
    %c14_i32_31 = arith.constant 14 : i32
    %68 = tpu.dynamic_rotate %67 by %c14_i32_31 dim 0 : vector<16x128xf32>, i32 -> vector<16x128xf32>
    %69 = arith.addf %66, %68 : vector<16x128xf32>
    %70 = vector.extract_strided_slice %62 {offsets = [0, 384], sizes = [16, 128], strides = [1, 1]} : vector<16x640xf32> to vector<16x128xf32>
    %c13_i32_32 = arith.constant 13 : i32
    %71 = tpu.dynamic_rotate %70 by %c13_i32_32 dim 0 : vector<16x128xf32>, i32 -> vector<16x128xf32>
    %72 = arith.addf %69, %71 : vector<16x128xf32>
    %73 = vector.extract_strided_slice %62 {offsets = [0, 512], sizes = [16, 128], strides = [1, 1]} : vector<16x640xf32> to vector<16x128xf32>
    %c12_i32 = arith.constant 12 : i32
    %74 = tpu.dynamic_rotate %73 by %c12_i32 dim 0 : vector<16x128xf32>, i32 -> vector<16x128xf32>
    %75 = arith.addf %72, %74 : vector<16x128xf32>
    %76 = vector.shape_cast %75 : vector<16x128xf32> to vector<2x8x128xf32>
    %c4_i32 = arith.constant 4 : i32
    %77 = vector.broadcast %c4_i32 : i32 to vector<1x8x128xi32>
    %78 = arith.cmpi slt, %3, %77 : vector<1x8x128xi32>
    %cst_33 = arith.constant 0xFF800000 : f32
    %79 = vector.shape_cast %78 : vector<1x8x128xi1> to vector<1x8x128xi1>
    %80 = vector.broadcast %79 : vector<1x8x128xi1> to vector<2x8x128xi1>
    %81 = vector.broadcast %cst_33 : f32 to vector<2x8x128xf32>
    %82 = arith.select %80, %76, %81 : vector<2x8x128xi1>, vector<2x8x128xf32>
    %cst_34 = arith.constant dense<0xFF800000> : vector<2x128xf32>
    %83 = vector.multi_reduction <maximumf>, %82, %cst_34 [1] : vector<2x8x128xf32> to vector<2x128xf32>
    %84 = vector.broadcast %61 : vector<1x128xf32> to vector<2x128xf32>
    %85 = arith.addf %83, %84 : vector<2x128xf32>
    %cst_35 = arith.constant 0.000000e+00 : f32
    %86 = vector.broadcast %cst_35 : f32 to vector<2x128xf32>
    %87 = arith.maximumf %85, %86 : vector<2x128xf32>
    %88 = vector.extract_strided_slice %2 {offsets = [2, 0, 0], sizes = [1, 128, 128], strides = [1, 1, 1]} : vector<3x128x128xf32> to vector<1x128x128xf32>
    %89 = vector.shape_cast %88 : vector<1x128x128xf32> to vector<128x128xf32>
    %cst_36 = arith.constant dense<0.000000e+00> : vector<2x128xf32>
    %90 = tpu.matmul %87, %89, %cst_36 {dimension_numbers = #tpu.dot_dimension_numbers<[1], [0], [0], [1], [0, 0, 1, 1], [], []>} : vector<2x128xf32>, vector<128x128xf32>, vector<2x128xf32> -> vector<2x128xf32>
    %91 = arith.addf %59, %90 : vector<2x128xf32>
    %c0_37 = arith.constant 0 : index
    %c0_38 = arith.constant 0 : index
    %92 = vector.load %arg9[%c0_37, %c0_38] : memref<1x128xf32, #tpu.memory_space<vmem>>, vector<1x128xf32>
    %93 = vector.broadcast %92 : vector<1x128xf32> to vector<2x128xf32>
    %94 = arith.addf %91, %93 : vector<2x128xf32>
    %c0_39 = arith.constant 0 : index
    %c0_40 = arith.constant 0 : index
    %95 = vector.load %arg10[%c0_39, %c0_40] : memref<2x128xf32, #tpu.memory_space<vmem>>, vector<2x128xf32>
    tpu.vector_store %arg10[%c0_39, %c0_40], %94 {strides = array<i32>} : memref<2x128xf32, #tpu.memory_space<vmem>>, vector<2x128xf32>,
    return
  }
  func.func @transform_0(%arg0: i32) -> (i32, i32, i32) {
    %c0_i32 = arith.constant 0 : i32
    %c0_i32_0 = arith.constant 0 : i32
    %c0_i32_1 = arith.constant 0 : i32
    return %arg0, %c0_i32, %c0_i32_0 : i32, i32, i32
  }
  func.func @transform_1(%arg0: i32) -> (i32, i32) {
    %c0_i32 = arith.constant 0 : i32
    %c0_i32_0 = arith.constant 0 : i32
    %c0_i32_1 = arith.constant 0 : i32
    return %c0_i32, %c0_i32_0 : i32, i32
  }
  func.func @transform_2(%arg0: i32) -> (i32, i32) {
    %c0_i32 = arith.constant 0 : i32
    %c0_i32_0 = arith.constant 0 : i32
    %c0_i32_1 = arith.constant 0 : i32
    return %c0_i32, %c0_i32_0 : i32, i32
  }
  func.func @transform_3(%arg0: i32) -> (i32, i32) {
    %c0_i32 = arith.constant 0 : i32
    %c0_i32_0 = arith.constant 0 : i32
    %c0_i32_1 = arith.constant 0 : i32
    return %c0_i32, %c0_i32_0 : i32, i32
  }
  func.func @transform_4(%arg0: i32) -> (i32, i32) {
    %c0_i32 = arith.constant 0 : i32
    %c0_i32_0 = arith.constant 0 : i32
    %c0_i32_1 = arith.constant 0 : i32
    return %c0_i32, %c0_i32_0 : i32, i32
  }
  func.func @transform_5(%arg0: i32) -> (i32, i32) {
    %c0_i32 = arith.constant 0 : i32
    %c0_i32_0 = arith.constant 0 : i32
    %c0_i32_1 = arith.constant 0 : i32
    return %c0_i32, %c0_i32_0 : i32, i32
  }
  func.func @transform_6(%arg0: i32) -> (i32, i32) {
    %c0_i32 = arith.constant 0 : i32
    %c0_i32_0 = arith.constant 0 : i32
    %c0_i32_1 = arith.constant 0 : i32
    return %c0_i32, %c0_i32_0 : i32, i32
  }
  func.func @transform_7(%arg0: i32) -> (i32, i32, i32) {
    %c0_i32 = arith.constant 0 : i32
    %c0_i32_0 = arith.constant 0 : i32
    %c0_i32_1 = arith.constant 0 : i32
    %c0_i32_2 = arith.constant 0 : i32
    return %c0_i32, %c0_i32_0, %c0_i32_1 : i32, i32, i32
  }
  func.func @transform_8(%arg0: i32) -> (i32, i32) {
    %c0_i32 = arith.constant 0 : i32
    %c0_i32_0 = arith.constant 0 : i32
    %c0_i32_1 = arith.constant 0 : i32
    return %c0_i32, %c0_i32_0 : i32, i32
  }
  func.func @transform_9(%arg0: i32) -> (i32, i32) {
    %c0_i32 = arith.constant 0 : i32
    %c0_i32_0 = arith.constant 0 : i32
    return %arg0, %c0_i32 : i32, i32
  }
}

</mosaic_0001>

<llo_original>
// kernel: tpu_custom_call.1
$region0: #{tpu_custom_call.1}
  #allocation0 [shape = 'u32[]', space=smem, size = 0x4, offset = 0x4, fixed_abs, tag = 'smem constant byte address 0x4 - core index']
  #allocation1 [shape = 'u32[144,128]{1,0:T(1,128)}', space=vmem, size = 0x12000, scoped, tag = 'internal scratch']
  %s0 = inlined_call_operand.hbm [shape: bf16[2,8,16], index: 0, kind: input, shape index: {}]
  %s1 = inlined_call_operand.hbm [shape: bf16[16,384], index: 1, kind: input, shape index: {}]
  %s2 = inlined_call_operand.vmem [shape: f32[1,128], index: 2, kind: input, shape index: {}]
  %s3 = inlined_call_operand.hbm [shape: bf16[16,512], index: 3, kind: input, shape index: {}]
  %s4 = inlined_call_operand.vmem [shape: f32[1,128], index: 4, kind: input, shape index: {}]
  %s5 = inlined_call_operand.hbm [shape: bf16[16,640], index: 5, kind: input, shape index: {}]
  %s6 = inlined_call_operand.vmem [shape: f32[1,128], index: 6, kind: input, shape index: {}]
  %s7 = inlined_call_operand.hbm [shape: f32[3,128,128], index: 7, kind: input, shape index: {}]
  %s8 = inlined_call_operand.vmem [shape: f32[1,128], index: 8, kind: input, shape index: {}]
  %s9 = inlined_call_operand.hbm [shape: f32[2,128], index: 9, kind: output, shape index: {}]
  %s10 = sld [smem:[#allocation0]]
  $region66: #{tpu_custom_call.1} parent=0
    _
  %s12 = ssub.s32 1, %s10
  %s13 = scalar_select 0, %s12, %s10
  $region1: #{tpu_custom_call.1} parent=0
    #allocation2 [shape = 'u8[4096]{0}', space=vmem, size = 0x1000, scoped, tag = 'input window, operand 0, single buffered']
    #allocation3 [shape = 's32[1]{0}', space=sflag, size = 0x4, scoped, tag = 'scoped memory for tpu_custom_call.1']
    #allocation4 [shape = 's32[1]{0}', space=sflag, size = 0x4, scoped, tag = 'scoped memory for tpu_custom_call.1']
    #allocation5 [shape = 'u8[12288]{0}', space=vmem, size = 0x3000, scoped, tag = 'input window, operand 1, single buffered']
    #allocation6 [shape = 's32[1]{0}', space=sflag, size = 0x4, scoped, tag = 'scoped memory for tpu_custom_call.1']
    #allocation7 [shape = 'u8[16384]{0}', space=vmem, size = 0x4000, scoped, tag = 'input window, operand 3, single buffered']
    #allocation8 [shape = 'u8[20480]{0}', space=vmem, size = 0x5000, scoped, tag = 'input window, operand 5, single buffered']
    #allocation9 [shape = 's32[1]{0}', space=sflag, size = 0x4, scoped, tag = 'scoped memory for tpu_custom_call.1']
    #allocation10 [shape = 'u8[196608]{0}', space=vmem, size = 0x30000, scoped, tag = 'input window, operand 7, single buffered']
    #allocation11 [shape = 'u8[1024]{0}', space=vmem, size = 0x400, scoped, tag = 'output window, operand 0, single buffered']
    %14 = vsyncpa [#allocation3], 0
    %15 = vsyncpa [#allocation6], 0
    %16 = vsyncpa [#allocation9], 0
    %17 = vsyncpa [#allocation4], 0
    // Predicated region
    $region2: #{tpu_custom_call.1} parent=1 // pred_check
      _
    $region3: #{tpu_custom_call.1} parent=1 // pred_check_branch
      %19 = sbr.rel (0) target = $region5
    $region4: #{tpu_custom_call.1} parent=1 // pred_region
      %s21 = ssub.s32 128, 128
      %22 = vsyncadd [#allocation3], %s21
      %s23 = sshll.u32 [#allocation2], 4
      %s24 = int_to_ptr.vmem [resolvable:$true] %s23
      %29 = dma.hbm_to_vmem [thread:$0]  %s0, 128, %s24, [#allocation3], 64, 64, 4
    $region5: #{tpu_custom_call.1} parent=1 // pred_fallthru
      _
    // Predicated region
    $region6: #{tpu_custom_call.1} parent=1 // pred_check
      _
    $region7: #{tpu_custom_call.1} parent=1 // pred_check_branch
      %31 = sbr.rel (0) target = $region9
    $region8: #{tpu_custom_call.1} parent=1 // pred_region
      %s33 = ssub.s32 384, 384
      %34 = vsyncadd [#allocation6], %s33
      %s35 = sshll.u32 [#allocation5], 4
      %s36 = int_to_ptr.vmem [resolvable:$true] %s35
      %41 = dma.hbm_to_vmem [thread:$0]  %s1, 384, %s36, [#allocation6], 192, 192, 12
    $region9: #{tpu_custom_call.1} parent=1 // pred_fallthru
      _
    // Predicated region
    $region10: #{tpu_custom_call.1} parent=1 // pred_check
      _
    $region11: #{tpu_custom_call.1} parent=1 // pred_check_branch
      %43 = sbr.rel (0) target = $region13
    $region12: #{tpu_custom_call.1} parent=1 // pred_region
      _
    $region13: #{tpu_custom_call.1} parent=1 // pred_fallthru
      _
    // Predicated region
    $region14: #{tpu_custom_call.1} parent=1 // pred_check
      _
    $region15: #{tpu_custom_call.1} parent=1 // pred_check_branch
      %45 = sbr.rel (0) target = $region17
    $region16: #{tpu_custom_call.1} parent=1 // pred_region
      %s47 = ssub.s32 512, 512
      %48 = vsyncadd [#allocation6], %s47
      %s49 = sshll.u32 [#allocation7], 4
      %s50 = int_to_ptr.vmem [resolvable:$true] %s49
      %55 = dma.hbm_to_vmem [thread:$0]  %s3, 512, %s50, [#allocation6], 256, 256, 16
    $region17: #{tpu_custom_call.1} parent=1 // pred_fallthru
      _
    // Predicated region
    $region18: #{tpu_custom_call.1} parent=1 // pred_check
      _
    $region19: #{tpu_custom_call.1} parent=1 // pred_check_branch
      %57 = sbr.rel (0) target = $region21
    $region20: #{tpu_custom_call.1} parent=1 // pred_region
      _
    $region21: #{tpu_custom_call.1} parent=1 // pred_fallthru
      _
    // Predicated region
    $region22: #{tpu_custom_call.1} parent=1 // pred_check
      _
    $region23: #{tpu_custom_call.1} parent=1 // pred_check_branch
      %59 = sbr.rel (0) target = $region25
    $region24: #{tpu_custom_call.1} parent=1 // pred_region
      %s61 = ssub.s32 640, 640
      %62 = vsyncadd [#allocation9], %s61
      %s63 = sshll.u32 [#allocation8], 4
      %s64 = int_to_ptr.vmem [resolvable:$true] %s63
      %69 = dma.hbm_to_vmem [thread:$0]  %s5, 640, %s64, [#allocation9], 320, 320, 20
    $region25: #{tpu_custom_call.1} parent=1 // pred_fallthru
      _
    // Predicated region
    $region26: #{tpu_custom_call.1} parent=1 // pred_check
      _
    $region27: #{tpu_custom_call.1} parent=1 // pred_check_branch
      %71 = sbr.rel (0) target = $region29
    $region28: #{tpu_custom_call.1} parent=1 // pred_region
      _
    $region29: #{tpu_custom_call.1} parent=1 // pred_fallthru
      _
    // Predicated region
    $region30: #{tpu_custom_call.1} parent=1 // pred_check
      _
    $region31: #{tpu_custom_call.1} parent=1 // pred_check_branch
      %73 = sbr.rel (0) target = $region33
    $region32: #{tpu_custom_call.1} parent=1 // pred_region
      %s75 = ssub.s32 6144, 6144
      %76 = vsyncadd [#allocation9], %s75
      %s77 = sshll.u32 [#allocation10], 4
      %s78 = int_to_ptr.vmem [resolvable:$true] %s77
      %83 = dma.hbm_to_vmem [thread:$0]  %s7, 6144, %s78, [#allocation9], 128, 128, 8
    $region33: #{tpu_custom_call.1} parent=1 // pred_fallthru
      _
    // Predicated region
    $region34: #{tpu_custom_call.1} parent=1 // pred_check
      _
    $region35: #{tpu_custom_call.1} parent=1 // pred_check_branch
      %85 = sbr.rel (0) target = $region37
    $region36: #{tpu_custom_call.1} parent=1 // pred_region
      _
    $region37: #{tpu_custom_call.1} parent=1 // pred_fallthru
      _
    // Predicated region
    $region38: #{tpu_custom_call.1} parent=1 // pred_check
      _
    $region39: #{tpu_custom_call.1} parent=1 // pred_check_branch
      %87 = sbr.rel (0) target = $region41
    $region40: #{tpu_custom_call.1} parent=1 // pred_region
      %88 = dma.done [#allocation3], 128
    $region41: #{tpu_custom_call.1} parent=1 // pred_fallthru
      _
    // Predicated region
    $region42: #{tpu_custom_call.1} parent=1 // pred_check
      _
    $region43: #{tpu_custom_call.1} parent=1 // pred_check_branch
      %90 = sbr.rel (0) target = $region45
    $region44: #{tpu_custom_call.1} parent=1 // pred_region
      %91 = dma.done [#allocation6], 384
    $region45: #{tpu_custom_call.1} parent=1 // pred_fallthru
      _
    // Predicated region
    $region46: #{tpu_custom_call.1} parent=1 // pred_check
      _
    $region47: #{tpu_custom_call.1} parent=1 // pred_check_branch
      %93 = sbr.rel (0) target = $region49
    $region48: #{tpu_custom_call.1} parent=1 // pred_region
      %94 = dma.done [#allocation6], 512
    $region49: #{tpu_custom_call.1} parent=1 // pred_fallthru
      _
    // Predicated region
    $region50: #{tpu_custom_call.1} parent=1 // pred_check
      _
    $region51: #{tpu_custom_call.1} parent=1 // pred_check_branch
      %96 = sbr.rel (0) target = $region53
    $region52: #{tpu_custom_call.1} parent=1 // pred_region
      %97 = dma.done [#allocation9], 640
    $region53: #{tpu_custom_call.1} parent=1 // pred_fallthru
      _
    // Predicated region
    $region54: #{tpu_custom_call.1} parent=1 // pred_check
      _
    $region55: #{tpu_custom_call.1} parent=1 // pred_check_branch
      %99 = sbr.rel (0) target = $region57
    $region56: #{tpu_custom_call.1} parent=1 // pred_region
      %100 = dma.done [#allocation9], 6144
    $region57: #{tpu_custom_call.1} parent=1 // pred_fallthru
      _
    %v102 = vld [vmem:[#allocation2] sm:$0xf]
    %v103 = vld [vmem:[#allocation2 + $0x4] sm:$0xf]
    %v104 = vld [vmem:[#allocation10] sm:$0xff]
    %v105 = vld [vmem:[#allocation10 + $0x8] sm:$0xff]
    %v106 = vld [vmem:[#allocation10 + $0x10] sm:$0xff]
    %v107 = vld [vmem:[#allocation10 + $0x18] sm:$0xff]
    %v108 = vld [vmem:[#allocation10 + $0x20] sm:$0xff]
    %v109 = vld [vmem:[#allocation10 + $0x28] sm:$0xff]
    %v110 = vld [vmem:[#allocation10 + $0x30] sm:$0xff]
    %v111 = vld [vmem:[#allocation10 + $0x38] sm:$0xff]
    %v112 = vld [vmem:[#allocation10 + $0x40] sm:$0xff]
    %v113 = vld [vmem:[#allocation10 + $0x48] sm:$0xff]
    %v114 = vld [vmem:[#allocation10 + $0x50] sm:$0xff]
    %v115 = vld [vmem:[#allocation10 + $0x58] sm:$0xff]
    %v116 = vld [vmem:[#allocation10 + $0x60] sm:$0xff]
    %v117 = vld [vmem:[#allocation10 + $0x68] sm:$0xff]
    %v118 = vld [vmem:[#allocation10 + $0x70] sm:$0xff]
    %v119 = vld [vmem:[#allocation10 + $0x78] sm:$0xff]
    %v120 = vld [vmem:[#allocation10 + $0x80] sm:$0xff]
    %v121 = vld [vmem:[#allocation10 + $0x88] sm:$0xff]
    %v122 = vld [vmem:[#allocation10 + $0x90] sm:$0xff]
    %v123 = vld [vmem:[#allocation10 + $0x98] sm:$0xff]
    %v124 = vld [vmem:[#allocation10 + $0xa0] sm:$0xff]
    %v125 = vld [vmem:[#allocation10 + $0xa8] sm:$0xff]
    %v126 = vld [vmem:[#allocation10 + $0xb0] sm:$0xff]
    %v127 = vld [vmem:[#allocation10 + $0xb8] sm:$0xff]
    %v128 = vld [vmem:[#allocation10 + $0xc0] sm:$0xff]
    %v129 = vld [vmem:[#allocation10 + $0xc8] sm:$0xff]
    %v130 = vld [vmem:[#allocation10 + $0xd0] sm:$0xff]
    %v131 = vld [vmem:[#allocation10 + $0xd8] sm:$0xff]
    %v132 = vld [vmem:[#allocation10 + $0xe0] sm:$0xff]
    %v133 = vld [vmem:[#allocation10 + $0xe8] sm:$0xff]
    %v134 = vld [vmem:[#allocation10 + $0xf0] sm:$0xff]
    %v135 = vld [vmem:[#allocation10 + $0xf8] sm:$0xff]
    %v136 = vld [vmem:[#allocation10 + $0x100] sm:$0xff]
    %v137 = vld [vmem:[#allocation10 + $0x108] sm:$0xff]
    %v138 = vld [vmem:[#allocation10 + $0x110] sm:$0xff]
    %v139 = vld [vmem:[#allocation10 + $0x118] sm:$0xff]
    %v140 = vld [vmem:[#allocation10 + $0x120] sm:$0xff]
    %v141 = vld [vmem:[#allocation10 + $0x128] sm:$0xff]
    %v142 = vld [vmem:[#allocation10 + $0x130] sm:$0xff]
    %v143 = vld [vmem:[#allocation10 + $0x138] sm:$0xff]
    %v144 = vld [vmem:[#allocation10 + $0x140] sm:$0xff]
    %v145 = vld [vmem:[#allocation10 + $0x148] sm:$0xff]
    %v146 = vld [vmem:[#allocation10 + $0x150] sm:$0xff]
    %v147 = vld [vmem:[#allocation10 + $0x158] sm:$0xff]
    %v148 = vld [vmem:[#allocation10 + $0x160] sm:$0xff]
    %v149 = vld [vmem:[#allocation10 + $0x168] sm:$0xff]
    %v150 = vld [vmem:[#allocation10 + $0x170] sm:$0xff]
    %v151 = vld [vmem:[#allocation10 + $0x178] sm:$0xff]
    %v152 = vlaneseq
    %v153 = vshrl.u32 %v152, 7
    %v154 = vld [vmem:[#allocation5] sm:$0xff]
    %v155 = vld [vmem:[#allocation5 + $0x8] sm:$0xf]
    %v156 = vld [vmem:[#allocation5 + $0xc] sm:$0xff]
    %v157 = vld [vmem:[#allocation5 + $0x14] sm:$0xf]
    %v158 = vld [vmem:[%s2] sm:$0x1]
    %v161 = vunpack.c.l.b16 %v102
    %v162 = vunpack.c.l.b16 %v103
    %v163 = vpack.c.b16 %v162, %v161
    %v168 = vunpack.c.l.b16 %v154
    %v169 = vunpack.c.h.b16 %v154
    %v170 = vunpack.c.l.b16 %v155
    %v171 = vunpack.c.l.b16 %v156
    %v172 = vunpack.c.h.b16 %v156
    %v173 = vunpack.c.l.b16 %v157
    %v174 = vpack.c.b16 %v171, %v168
    %v175 = vpack.c.b16 %v172, %v169
    %v176 = vpack.c.b16 %v173, %v170
    %vm180 = vcmask 130048
    %v182 = vsel %vm180, %v163, 0
    %184 = vmatprep.subr.bf16.mxu0 %v175
    %185 = vmatpush1.bf16.msra.mxu0 %v174
    %186 = vmatprep.subr.bf16.mxu0 0
    %187 = vmatpush1.bf16.msra.mxu0 0
    %188 = vmatprep.subr.bf16.mxu0 0
    %189 = vmatpush1.bf16.msra.mxu0 0
    %190 = vmatprep.subr.bf16.mxu0 0
    %191 = vmatpush1.bf16.msra.mxu0 0
    %192 = vmatprep.subr.bf16.mxu0 0
    %193 = vmatpush1.bf16.msra.mxu0 0
    %194 = vmatprep.subr.bf16.mxu0 0
    %195 = vmatpush1.bf16.msra.mxu0 0
    %196 = vmatprep.subr.bf16.mxu0 0
    %197 = vmatpush1.bf16.msra.mxu0 0
    %198 = vmatprep.subr.bf16.mxu0 0
    %199 = vmatpush1.bf16.msra.mxu0 0
    %200 = vmatprep.subr.bf16.mxu0 0
    %201 = vmatpush1.bf16.msra.mxu0 0
    %202 = vmatprep.subr.bf16.mxu0 0
    %203 = vmatpush1.bf16.msra.mxu0 0
    %204 = vmatprep.subr.bf16.mxu0 0
    %205 = vmatpush1.bf16.msra.mxu0 0
    %206 = vmatprep.subr.bf16.mxu0 0
    %207 = vmatpush1.bf16.msra.mxu0 0
    %208 = vmatprep.subr.bf16.mxu0 0
    %209 = vmatpush1.bf16.msra.mxu0 0
    %210 = vmatprep.subr.bf16.mxu0 0
    %211 = vmatpush1.bf16.msra.mxu0 0
    %212 = vmatprep.subr.bf16.mxu0 0
    %213 = vmatpush1.bf16.msra.mxu0 0
    %214 = vmatprep.subr.bf16.mxu0 0
    %215 = vmatpush1.bf16.msra.mxu0 0
    %216 = vmatprep.mubr.bf16.mxu0 0
    %217 = vmatmul.mubr.bf16.gmra.mrb[0].mxu0 %v182
    %v218 = vpop.f32.mrb[0].mxu0
    %v219 = vadd.f32 0.0, %v218
    %v220 = vpop.f32.mrb[0].mxu0
    %v221 = vadd.f32 0.0, %v220
    %v222 = vpop.f32.mrb[0].mxu0
    %v223 = vadd.f32 0.0, %v222
    %v224 = vpop.f32.mrb[0].mxu0
    %v225 = vadd.f32 0.0, %v224
    %226 = vdwg.mxu0
    %227 = vmatprep.subr.bf16.mxu0 0
    %228 = vmatpush1.bf16.msra.mxu0 %v176
    %229 = vmatprep.subr.bf16.mxu0 0
    %230 = vmatpush1.bf16.msra.mxu0 0
    %231 = vmatprep.subr.bf16.mxu0 0
    %232 = vmatpush1.bf16.msra.mxu0 0
    %233 = vmatprep.subr.bf16.mxu0 0
    %234 = vmatpush1.bf16.msra.mxu0 0
    %235 = vmatprep.subr.bf16.mxu0 0
    %236 = vmatpush1.bf16.msra.mxu0 0
    %237 = vmatprep.subr.bf16.mxu0 0
    %238 = vmatpush1.bf16.msra.mxu0 0
    %239 = vmatprep.subr.bf16.mxu0 0
    %240 = vmatpush1.bf16.msra.mxu0 0
    %241 = vmatprep.subr.bf16.mxu0 0
    %242 = vmatpush1.bf16.msra.mxu0 0
    %243 = vmatprep.subr.bf16.mxu0 0
    %244 = vmatpush1.bf16.msra.mxu0 0
    %245 = vmatprep.subr.bf16.mxu0 0
    %246 = vmatpush1.bf16.msra.mxu0 0
    %247 = vmatprep.subr.bf16.mxu0 0
    %248 = vmatpush1.bf16.msra.mxu0 0
    %249 = vmatprep.subr.bf16.mxu0 0
    %250 = vmatpush1.bf16.msra.mxu0 0
    %251 = vmatprep.subr.bf16.mxu0 0
    %252 = vmatpush1.bf16.msra.mxu0 0
    %253 = vmatprep.subr.bf16.mxu0 0
    %254 = vmatpush1.bf16.msra.mxu0 0
    %255 = vmatprep.subr.bf16.mxu0 0
    %256 = vmatpush1.bf16.msra.mxu0 0
    %257 = vmatprep.subr.bf16.mxu0 0
    %258 = vmatpush1.bf16.msra.mxu0 0
    %259 = vmatprep.mubr.bf16.mxu0 0
    %260 = vmatmul.mubr.bf16.gmra.mrb[0].mxu0 %v182
    %v261 = vpop.f32.mrb[0].mxu0
    %v262 = vadd.f32 0.0, %v261
    %v263 = vpop.f32.mrb[0].mxu0
    %v264 = vpop.f32.mrb[0].mxu0
    %v265 = vadd.f32 0.0, %v264
    %v266 = vpop.f32.mrb[0].mxu0
    %267 = vdwg.mxu0
    %v268 = vrot.slane %v221, 1
    %v269 = vrot.slane %v225, 1
    %vm270 = vcmp.lt.s32.totalorder %v153, 7
    %v271 = vsel %vm270, %v268, %v269
    %v272 = vsel %vm270, %v269, %v268
    %v273 = vadd.f32 %v219, %v271
    %v274 = vadd.f32 %v223, %v272
    %v275 = vrot.slane %v262, 2
    %v276 = vrot.slane %v265, 2
    %vm277 = vcmp.lt.s32.totalorder %v153, 6
    %v278 = vsel %vm277, %v275, %v276
    %v279 = vsel %vm277, %v276, %v275
    %v280 = vadd.f32 %v273, %v278
    %v281 = vadd.f32 %v274, %v279
    %v282 = vsel %vm277, 1, 0
    %vm283 = vcmp.eq.s32.totalorder %v282, 1
    %v284 = vsel %vm283, %v280, -inf
    %v285 = vsel %vm283, %v281, -inf
    %v286 = vrot.slane %v284, 4
    %v287 = vmax.f32 %v284, %v286
    %v288 = vrot.slane %v287, 2
    %v289 = vmax.f32 %v287, %v288
    %v290 = vrot.slane %v289, 1
    %v291 = vmax.f32 %v289, %v290
    %v292 = vrot.slane %v285, 4
    %v293 = vmax.f32 %v285, %v292
    %v294 = vrot.slane %v293, 2
    %v295 = vmax.f32 %v293, %v294
    %v296 = vrot.slane %v295, 1
    %v297 = vmax.f32 %v295, %v296
    %v299 = vlaneseq
    %v300 = vshrl.u32 %v299, 7
    %v301 = vsub.s32 0, %v300
    %v302 = vrot.slane %v158, %v301
    %v304 = vadd.f32 %v291, %v302
    %v305 = vadd.f32 %v297, %v302
    %v306 = vmax.f32 %v304, 0.0
    %v307 = vmax.f32 %v305, 0.0
    %v308 = vld [vmem:[#allocation7] sm:$0xff]
    %v309 = vld [vmem:[#allocation7 + $0x8] sm:$0xff]
    %v310 = vld [vmem:[#allocation7 + $0x10] sm:$0xff]
    %v311 = vld [vmem:[#allocation7 + $0x18] sm:$0xff]
    %v312 = vld [vmem:[%s4] sm:$0x1]
    %v317 = vunpack.c.l.b16 %v308
    %v318 = vunpack.c.h.b16 %v308
    %v319 = vunpack.c.l.b16 %v309
    %v320 = vunpack.c.h.b16 %v309
    %v321 = vunpack.c.l.b16 %v310
    %v322 = vunpack.c.h.b16 %v310
    %v323 = vunpack.c.l.b16 %v311
    %v324 = vunpack.c.h.b16 %v311
    %v325 = vpack.c.b16 %v321, %v317
    %v326 = vpack.c.b16 %v322, %v318
    %v327 = vpack.c.b16 %v323, %v319
    %v328 = vpack.c.b16 %v324, %v320
    %333 = vmatprep.subr.bf16.mxu0 %v326
    %334 = vmatpush1.bf16.msra.mxu0 %v325
    %335 = vmatprep.subr.bf16.mxu0 0
    %336 = vmatpush1.bf16.msra.mxu0 0
    %337 = vmatprep.subr.bf16.mxu0 0
    %338 = vmatpush1.bf16.msra.mxu0 0
    %339 = vmatprep.subr.bf16.mxu0 0
    %340 = vmatpush1.bf16.msra.mxu0 0
    %341 = vmatprep.subr.bf16.mxu0 0
    %342 = vmatpush1.bf16.msra.mxu0 0
    %343 = vmatprep.subr.bf16.mxu0 0
    %344 = vmatpush1.bf16.msra.mxu0 0
    %345 = vmatprep.subr.bf16.mxu0 0
    %346 = vmatpush1.bf16.msra.mxu0 0
    %347 = vmatprep.subr.bf16.mxu0 0
    %348 = vmatpush1.bf16.msra.mxu0 0
    %349 = vmatprep.subr.bf16.mxu0 0
    %350 = vmatpush1.bf16.msra.mxu0 0
    %351 = vmatprep.subr.bf16.mxu0 0
    %352 = vmatpush1.bf16.msra.mxu0 0
    %353 = vmatprep.subr.bf16.mxu0 0
    %354 = vmatpush1.bf16.msra.mxu0 0
    %355 = vmatprep.subr.bf16.mxu0 0
    %356 = vmatpush1.bf16.msra.mxu0 0
    %357 = vmatprep.subr.bf16.mxu0 0
    %358 = vmatpush1.bf16.msra.mxu0 0
    %359 = vmatprep.subr.bf16.mxu0 0
    %360 = vmatpush1.bf16.msra.mxu0 0
    %361 = vmatprep.subr.bf16.mxu0 0
    %362 = vmatpush1.bf16.msra.mxu0 0
    %363 = vmatprep.subr.bf16.mxu0 0
    %364 = vmatpush1.bf16.msra.mxu0 0
    %365 = vmatprep.mubr.bf16.mxu0 0
    %366 = vmatmul.mubr.bf16.gmra.mrb[0].mxu0 %v182
    %v367 = vpop.f32.mrb[0].mxu0
    %v368 = vadd.f32 0.0, %v367
    %v369 = vpop.f32.mrb[0].mxu0
    %v370 = vadd.f32 0.0, %v369
    %v371 = vpop.f32.mrb[0].mxu0
    %v372 = vadd.f32 0.0, %v371
    %v373 = vpop.f32.mrb[0].mxu0
    %v374 = vadd.f32 0.0, %v373
    %375 = vdwg.mxu0
    %376 = vmatprep.subr.bf16.mxu0 %v328
    %377 = vmatpush1.bf16.msra.mxu0 %v327
    %378 = vmatprep.subr.bf16.mxu0 0
    %379 = vmatpush1.bf16.msra.mxu0 0
    %380 = vmatprep.subr.bf16.mxu0 0
    %381 = vmatpush1.bf16.msra.mxu0 0
    %382 = vmatprep.subr.bf16.mxu0 0
    %383 = vmatpush1.bf16.msra.mxu0 0
    %384 = vmatprep.subr.bf16.mxu0 0
    %385 = vmatpush1.bf16.msra.mxu0 0
    %386 = vmatprep.subr.bf16.mxu0 0
    %387 = vmatpush1.bf16.msra.mxu0 0
    %388 = vmatprep.subr.bf16.mxu0 0
    %389 = vmatpush1.bf16.msra.mxu0 0
    %390 = vmatprep.subr.bf16.mxu0 0
    %391 = vmatpush1.bf16.msra.mxu0 0
    %392 = vmatprep.subr.bf16.mxu0 0
    %393 = vmatpush1.bf16.msra.mxu0 0
    %394 = vmatprep.subr.bf16.mxu0 0
    %395 = vmatpush1.bf16.msra.mxu0 0
    %396 = vmatprep.subr.bf16.mxu0 0
    %397 = vmatpush1.bf16.msra.mxu0 0
    %398 = vmatprep.subr.bf16.mxu0 0
    %399 = vmatpush1.bf16.msra.mxu0 0
    %400 = vmatprep.subr.bf16.mxu0 0
    %401 = vmatpush1.bf16.msra.mxu0 0
    %402 = vmatprep.subr.bf16.mxu0 0
    %403 = vmatpush1.bf16.msra.mxu0 0
    %404 = vmatprep.subr.bf16.mxu0 0
    %405 = vmatpush1.bf16.msra.mxu0 0
    %406 = vmatprep.subr.bf16.mxu0 0
    %407 = vmatpush1.bf16.msra.mxu0 0
    %408 = vmatprep.mubr.bf16.mxu0 0
    %409 = vmatmul.mubr.bf16.gmra.mrb[0].mxu0 %v182
    %v410 = vpop.f32.mrb[0].mxu0
    %v411 = vadd.f32 0.0, %v410
    %v412 = vpop.f32.mrb[0].mxu0
    %v413 = vadd.f32 0.0, %v412
    %v414 = vpop.f32.mrb[0].mxu0
    %v415 = vadd.f32 0.0, %v414
    %v416 = vpop.f32.mrb[0].mxu0
    %v417 = vadd.f32 0.0, %v416
    %418 = vdwg.mxu0
    %v419 = vrot.slane %v370, 1
    %v420 = vrot.slane %v374, 1
    %v421 = vsel %vm270, %v419, %v420
    %v422 = vsel %vm270, %v420, %v419
    %v423 = vadd.f32 %v368, %v421
    %v424 = vadd.f32 %v372, %v422
    %v425 = vrot.slane %v411, 2
    %v426 = vrot.slane %v415, 2
    %v427 = vsel %vm277, %v425, %v426
    %v428 = vsel %vm277, %v426, %v425
    %v429 = vadd.f32 %v423, %v427
    %v430 = vadd.f32 %v424, %v428
    %v431 = vrot.slane %v413, 3
    %v432 = vrot.slane %v417, 3
    %vm433 = vcmp.lt.s32.totalorder %v153, 5
    %v434 = vsel %vm433, %v431, %v432
    %v435 = vsel %vm433, %v432, %v431
    %v436 = vadd.f32 %v429, %v434
    %v437 = vadd.f32 %v430, %v435
    %v438 = vsel %vm433, 1, 0
    %vm439 = vcmp.eq.s32.totalorder %v438, 1
    %v440 = vsel %vm439, %v436, -inf
    %v441 = vsel %vm439, %v437, -inf
    %v442 = vrot.slane %v440, 4
    %v443 = vmax.f32 %v440, %v442
    %v444 = vrot.slane %v443, 2
    %v445 = vmax.f32 %v443, %v444
    %v446 = vrot.slane %v445, 1
    %v447 = vmax.f32 %v445, %v446
    %v448 = vrot.slane %v441, 4
    %v449 = vmax.f32 %v441, %v448
    %v450 = vrot.slane %v449, 2
    %v451 = vmax.f32 %v449, %v450
    %v452 = vrot.slane %v451, 1
    %v453 = vmax.f32 %v451, %v452
    %v455 = vlaneseq
    %v456 = vshrl.u32 %v455, 7
    %v457 = vsub.s32 0, %v456
    %v458 = vrot.slane %v312, %v457
    %v460 = vadd.f32 %v447, %v458
    %v461 = vadd.f32 %v453, %v458
    %v462 = vmax.f32 %v460, 0.0
    %v463 = vmax.f32 %v461, 0.0
    %v466 = vrot.slane %v463, 7
    %vm467 = vcmask 1041409
    %v468 = vsel %vm467, %v466, %v462
    %470 = vmatprep.subr.mxu0 0.0
    %471 = vmatpush1.msra.mxu0 %v120
    %472 = vmatprep.subr.mxu0 0.0
    %473 = vmatpush1.msra.mxu0 %v121
    %474 = vmatprep.subr.mxu0 0.0
    %475 = vmatpush1.msra.mxu0 %v122
    %476 = vmatprep.subr.mxu0 0.0
    %477 = vmatpush1.msra.mxu0 %v123
    %478 = vmatprep.subr.mxu0 0.0
    %479 = vmatpush1.msra.mxu0 %v124
    %480 = vmatprep.subr.mxu0 0.0
    %481 = vmatpush1.msra.mxu0 %v125
    %482 = vmatprep.subr.mxu0 0.0
    %483 = vmatpush1.msra.mxu0 %v126
    %484 = vmatprep.subr.mxu0 0.0
    %485 = vmatpush1.msra.mxu0 %v127
    %486 = vmatprep.subr.mxu0 0.0
    %487 = vmatpush1.msra.mxu0 %v128
    %488 = vmatprep.subr.mxu0 0.0
    %489 = vmatpush1.msra.mxu0 %v129
    %490 = vmatprep.subr.mxu0 0.0
    %491 = vmatpush1.msra.mxu0 %v130
    %492 = vmatprep.subr.mxu0 0.0
    %493 = vmatpush1.msra.mxu0 %v131
    %494 = vmatprep.subr.mxu0 0.0
    %495 = vmatpush1.msra.mxu0 %v132
    %496 = vmatprep.subr.mxu0 0.0
    %497 = vmatpush1.msra.mxu0 %v133
    %498 = vmatprep.subr.mxu0 0.0
    %499 = vmatpush1.msra.mxu0 %v134
    %500 = vmatprep.subr.mxu0 0.0
    %501 = vmatpush1.msra.mxu0 %v135
    %502 = vmatprep.subr.mxu0 0.0
    %503 = vmatpush1.msra.mxu0 0.0
    %504 = vmatprep.subr.mxu0 0.0
    %505 = vmatpush1.msra.mxu0 0.0
    %506 = vmatprep.subr.mxu0 0.0
    %507 = vmatpush1.msra.mxu0 0.0
    %508 = vmatprep.subr.mxu0 0.0
    %509 = vmatpush1.msra.mxu0 0.0
    %510 = vmatprep.subr.mxu0 0.0
    %511 = vmatpush1.msra.mxu0 0.0
    %512 = vmatprep.subr.mxu0 0.0
    %513 = vmatpush1.msra.mxu0 0.0
    %514 = vmatprep.subr.mxu0 0.0
    %515 = vmatpush1.msra.mxu0 0.0
    %516 = vmatprep.subr.mxu0 0.0
    %517 = vmatpush1.msra.mxu0 0.0
    %518 = vmatprep.subr.mxu0 0.0
    %519 = vmatpush1.msra.mxu0 0.0
    %520 = vmatprep.subr.mxu0 0.0
    %521 = vmatpush1.msra.mxu0 0.0
    %522 = vmatprep.subr.mxu0 0.0
    %523 = vmatpush1.msra.mxu0 0.0
    %524 = vmatprep.subr.mxu0 0.0
    %525 = vmatpush1.msra.mxu0 0.0
    %526 = vmatprep.subr.mxu0 0.0
    %527 = vmatpush1.msra.mxu0 0.0
    %528 = vmatprep.subr.mxu0 0.0
    %529 = vmatpush1.msra.mxu0 0.0
    %530 = vmatprep.subr.mxu0 0.0
    %531 = vmatpush1.msra.mxu0 0.0
    %532 = vmatprep.subr.mxu0 0.0
    %533 = vmatpush1.msra.mxu0 0.0
    %534 = vmatprep.mubr.f32.mxu0 0.0
    %535 = vmatmul.mubr.f32.gmra.mrb[0].mxu0 %v468
    %v536 = vpop.f32.mrb[0].mxu0
    %v537 = vadd.f32 0.0, %v536
    %v538 = vpop.f32.mrb[0].mxu0
    %539 = vdwg.mxu0
    %v542 = vrot.slane %v307, 7
    %v543 = vsel %vm467, %v542, %v306
    %545 = vmatprep.subr.mxu0 0.0
    %546 = vmatpush1.msra.mxu0 %v104
    %547 = vmatprep.subr.mxu0 0.0
    %548 = vmatpush1.msra.mxu0 %v105
    %549 = vmatprep.subr.mxu0 0.0
    %550 = vmatpush1.msra.mxu0 %v106
    %551 = vmatprep.subr.mxu0 0.0
    %552 = vmatpush1.msra.mxu0 %v107
    %553 = vmatprep.subr.mxu0 0.0
    %554 = vmatpush1.msra.mxu0 %v108
    %555 = vmatprep.subr.mxu0 0.0
    %556 = vmatpush1.msra.mxu0 %v109
    %557 = vmatprep.subr.mxu0 0.0
    %558 = vmatpush1.msra.mxu0 %v110
    %559 = vmatprep.subr.mxu0 0.0
    %560 = vmatpush1.msra.mxu0 %v111
    %561 = vmatprep.subr.mxu0 0.0
    %562 = vmatpush1.msra.mxu0 %v112
    %563 = vmatprep.subr.mxu0 0.0
    %564 = vmatpush1.msra.mxu0 %v113
    %565 = vmatprep.subr.mxu0 0.0
    %566 = vmatpush1.msra.mxu0 %v114
    %567 = vmatprep.subr.mxu0 0.0
    %568 = vmatpush1.msra.mxu0 %v115
    %569 = vmatprep.subr.mxu0 0.0
    %570 = vmatpush1.msra.mxu0 %v116
    %571 = vmatprep.subr.mxu0 0.0
    %572 = vmatpush1.msra.mxu0 %v117
    %573 = vmatprep.subr.mxu0 0.0
    %574 = vmatpush1.msra.mxu0 %v118
    %575 = vmatprep.subr.mxu0 0.0
    %576 = vmatpush1.msra.mxu0 %v119
    %577 = vmatprep.subr.mxu0 0.0
    %578 = vmatpush1.msra.mxu0 0.0
    %579 = vmatprep.subr.mxu0 0.0
    %580 = vmatpush1.msra.mxu0 0.0
    %581 = vmatprep.subr.mxu0 0.0
    %582 = vmatpush1.msra.mxu0 0.0
    %583 = vmatprep.subr.mxu0 0.0
    %584 = vmatpush1.msra.mxu0 0.0
    %585 = vmatprep.subr.mxu0 0.0
    %586 = vmatpush1.msra.mxu0 0.0
    %587 = vmatprep.subr.mxu0 0.0
    %588 = vmatpush1.msra.mxu0 0.0
    %589 = vmatprep.subr.mxu0 0.0
    %590 = vmatpush1.msra.mxu0 0.0
    %591 = vmatprep.subr.mxu0 0.0
    %592 = vmatpush1.msra.mxu0 0.0
    %593 = vmatprep.subr.mxu0 0.0
    %594 = vmatpush1.msra.mxu0 0.0
    %595 = vmatprep.subr.mxu0 0.0
    %596 = vmatpush1.msra.mxu0 0.0
    %597 = vmatprep.subr.mxu0 0.0
    %598 = vmatpush1.msra.mxu0 0.0
    %599 = vmatprep.subr.mxu0 0.0
    %600 = vmatpush1.msra.mxu0 0.0
    %601 = vmatprep.subr.mxu0 0.0
    %602 = vmatpush1.msra.mxu0 0.0
    %603 = vmatprep.subr.mxu0 0.0
    %604 = vmatpush1.msra.mxu0 0.0
    %605 = vmatprep.subr.mxu0 0.0
    %606 = vmatpush1.msra.mxu0 0.0
    %607 = vmatprep.subr.mxu0 0.0
    %608 = vmatpush1.msra.mxu0 0.0
    %609 = vmatprep.mubr.f32.mxu0 0.0
    %610 = vmatmul.mubr.f32.gmra.mrb[0].mxu0 %v543
    %v611 = vpop.f32.mrb[0].mxu0
    %v612 = vadd.f32 %v537, %v611
    %v613 = vpop.f32.mrb[0].mxu0
    %614 = vdwg.mxu0
    %v615 = vld [vmem:[#allocation8] sm:$0xff]
    %v616 = vld [vmem:[#allocation8 + $0x8] sm:$0xff]
    %v617 = vld [vmem:[#allocation8 + $0x10] sm:$0xf]
    %v618 = vld [vmem:[#allocation8 + $0x14] sm:$0xff]
    %v619 = vld [vmem:[#allocation8 + $0x1c] sm:$0xff]
    %v620 = vld [vmem:[#allocation8 + $0x24] sm:$0xf]
    %v621 = vld [vmem:[%s6] sm:$0x1]
    %v628 = vunpack.c.l.b16 %v615
    %v629 = vunpack.c.h.b16 %v615
    %v630 = vunpack.c.l.b16 %v616
    %v631 = vunpack.c.h.b16 %v616
    %v632 = vunpack.c.l.b16 %v617
    %v633 = vunpack.c.l.b16 %v618
    %v634 = vunpack.c.h.b16 %v618
    %v635 = vunpack.c.l.b16 %v619
    %v636 = vunpack.c.h.b16 %v619
    %v637 = vunpack.c.l.b16 %v620
    %v638 = vpack.c.b16 %v633, %v628
    %v639 = vpack.c.b16 %v634, %v629
    %v640 = vpack.c.b16 %v635, %v630
    %v641 = vpack.c.b16 %v636, %v631
    %v642 = vpack.c.b16 %v637, %v632
    %648 = vmatprep.subr.bf16.mxu0 %v639
    %649 = vmatpush1.bf16.msra.mxu0 %v638
    %650 = vmatprep.subr.bf16.mxu0 0
    %651 = vmatpush1.bf16.msra.mxu0 0
    %652 = vmatprep.subr.bf16.mxu0 0
    %653 = vmatpush1.bf16.msra.mxu0 0
    %654 = vmatprep.subr.bf16.mxu0 0
    %655 = vmatpush1.bf16.msra.mxu0 0
    %656 = vmatprep.subr.bf16.mxu0 0
    %657 = vmatpush1.bf16.msra.mxu0 0
    %658 = vmatprep.subr.bf16.mxu0 0
    %659 = vmatpush1.bf16.msra.mxu0 0
    %660 = vmatprep.subr.bf16.mxu0 0
    %661 = vmatpush1.bf16.msra.mxu0 0
    %662 = vmatprep.subr.bf16.mxu0 0
    %663 = vmatpush1.bf16.msra.mxu0 0
    %664 = vmatprep.subr.bf16.mxu0 0
    %665 = vmatpush1.bf16.msra.mxu0 0
    %666 = vmatprep.subr.bf16.mxu0 0
    %667 = vmatpush1.bf16.msra.mxu0 0
    %668 = vmatprep.subr.bf16.mxu0 0
    %669 = vmatpush1.bf16.msra.mxu0 0
    %670 = vmatprep.subr.bf16.mxu0 0
    %671 = vmatpush1.bf16.msra.mxu0 0
    %672 = vmatprep.subr.bf16.mxu0 0
    %673 = vmatpush1.bf16.msra.mxu0 0
    %674 = vmatprep.subr.bf16.mxu0 0
    %675 = vmatpush1.bf16.msra.mxu0 0
    %676 = vmatprep.subr.bf16.mxu0 0
    %677 = vmatpush1.bf16.msra.mxu0 0
    %678 = vmatprep.subr.bf16.mxu0 0
    %679 = vmatpush1.bf16.msra.mxu0 0
    %680 = vmatprep.mubr.bf16.mxu0 0
    %681 = vmatmul.mubr.bf16.gmra.mrb[0].mxu0 %v182
    %v682 = vpop.f32.mrb[0].mxu0
    %v683 = vadd.f32 0.0, %v682
    %v684 = vpop.f32.mrb[0].mxu0
    %v685 = vadd.f32 0.0, %v684
    %v686 = vpop.f32.mrb[0].mxu0
    %v687 = vadd.f32 0.0, %v686
    %v688 = vpop.f32.mrb[0].mxu0
    %v689 = vadd.f32 0.0, %v688
    %690 = vdwg.mxu0
    %691 = vmatprep.subr.bf16.mxu0 %v641
    %692 = vmatpush1.bf16.msra.mxu0 %v640
    %693 = vmatprep.subr.bf16.mxu0 0
    %694 = vmatpush1.bf16.msra.mxu0 0
    %695 = vmatprep.subr.bf16.mxu0 0
    %696 = vmatpush1.bf16.msra.mxu0 0
    %697 = vmatprep.subr.bf16.mxu0 0
    %698 = vmatpush1.bf16.msra.mxu0 0
    %699 = vmatprep.subr.bf16.mxu0 0
    %700 = vmatpush1.bf16.msra.mxu0 0
    %701 = vmatprep.subr.bf16.mxu0 0
    %702 = vmatpush1.bf16.msra.mxu0 0
    %703 = vmatprep.subr.bf16.mxu0 0
    %704 = vmatpush1.bf16.msra.mxu0 0
    %705 = vmatprep.subr.bf16.mxu0 0
    %706 = vmatpush1.bf16.msra.mxu0 0
    %707 = vmatprep.subr.bf16.mxu0 0
    %708 = vmatpush1.bf16.msra.mxu0 0
    %709 = vmatprep.subr.bf16.mxu0 0
    %710 = vmatpush1.bf16.msra.mxu0 0
    %711 = vmatprep.subr.bf16.mxu0 0
    %712 = vmatpush1.bf16.msra.mxu0 0
    %713 = vmatprep.subr.bf16.mxu0 0
    %714 = vmatpush1.bf16.msra.mxu0 0
    %715 = vmatprep.subr.bf16.mxu0 0
    %716 = vmatpush1.bf16.msra.mxu0 0
    %717 = vmatprep.subr.bf16.mxu0 0
    %718 = vmatpush1.bf16.msra.mxu0 0
    %719 = vmatprep.subr.bf16.mxu0 0
    %720 = vmatpush1.bf16.msra.mxu0 0
    %721 = vmatprep.subr.bf16.mxu0 0
    %722 = vmatpush1.bf16.msra.mxu0 0
    %723 = vmatprep.mubr.bf16.mxu0 0
    %724 = vmatmul.mubr.bf16.gmra.mrb[0].mxu0 %v182
    %v725 = vpop.f32.mrb[0].mxu0
    %v726 = vadd.f32 0.0, %v725
    %v727 = vpop.f32.mrb[0].mxu0
    %v728 = vadd.f32 0.0, %v727
    %v729 = vpop.f32.mrb[0].mxu0
    %v730 = vadd.f32 0.0, %v729
    %v731 = vpop.f32.mrb[0].mxu0
    %v732 = vadd.f32 0.0, %v731
    %733 = vdwg.mxu0
    %734 = vmatprep.subr.bf16.mxu0 0
    %735 = vmatpush1.bf16.msra.mxu0 %v642
    %736 = vmatprep.subr.bf16.mxu0 0
    %737 = vmatpush1.bf16.msra.mxu0 0
    %738 = vmatprep.subr.bf16.mxu0 0
    %739 = vmatpush1.bf16.msra.mxu0 0
    %740 = vmatprep.subr.bf16.mxu0 0
    %741 = vmatpush1.bf16.msra.mxu0 0
    %742 = vmatprep.subr.bf16.mxu0 0
    %743 = vmatpush1.bf16.msra.mxu0 0
    %744 = vmatprep.subr.bf16.mxu0 0
    %745 = vmatpush1.bf16.msra.mxu0 0
    %746 = vmatprep.subr.bf16.mxu0 0
    %747 = vmatpush1.bf16.msra.mxu0 0
    %748 = vmatprep.subr.bf16.mxu0 0
    %749 = vmatpush1.bf16.msra.mxu0 0
    %750 = vmatprep.subr.bf16.mxu0 0
    %751 = vmatpush1.bf16.msra.mxu0 0
    %752 = vmatprep.subr.bf16.mxu0 0
    %753 = vmatpush1.bf16.msra.mxu0 0
    %754 = vmatprep.subr.bf16.mxu0 0
    %755 = vmatpush1.bf16.msra.mxu0 0
    %756 = vmatprep.subr.bf16.mxu0 0
    %757 = vmatpush1.bf16.msra.mxu0 0
    %758 = vmatprep.subr.bf16.mxu0 0
    %759 = vmatpush1.bf16.msra.mxu0 0
    %760 = vmatprep.subr.bf16.mxu0 0
    %761 = vmatpush1.bf16.msra.mxu0 0
    %762 = vmatprep.subr.bf16.mxu0 0
    %763 = vmatpush1.bf16.msra.mxu0 0
    %764 = vmatprep.subr.bf16.mxu0 0
    %765 = vmatpush1.bf16.msra.mxu0 0
    %766 = vmatprep.mubr.bf16.mxu0 0
    %767 = vmatmul.mubr.bf16.gmra.mrb[0].mxu0 %v182
    %v768 = vpop.f32.mrb[0].mxu0
    %v769 = vadd.f32 0.0, %v768
    %v770 = vpop.f32.mrb[0].mxu0
    %v771 = vpop.f32.mrb[0].mxu0
    %v772 = vadd.f32 0.0, %v771
    %v773 = vpop.f32.mrb[0].mxu0
    %774 = vdwg.mxu0
    %v775 = vrot.slane %v685, 1
    %v776 = vrot.slane %v689, 1
    %v777 = vsel %vm270, %v775, %v776
    %v778 = vsel %vm270, %v776, %v775
    %v779 = vadd.f32 %v683, %v777
    %v780 = vadd.f32 %v687, %v778
    %v781 = vrot.slane %v726, 2
    %v782 = vrot.slane %v730, 2
    %v783 = vsel %vm277, %v781, %v782
    %v784 = vsel %vm277, %v782, %v781
    %v785 = vadd.f32 %v779, %v783
    %v786 = vadd.f32 %v780, %v784
    %v787 = vrot.slane %v728, 3
    %v788 = vrot.slane %v732, 3
    %v789 = vsel %vm433, %v787, %v788
    %v790 = vsel %vm433, %v788, %v787
    %v791 = vadd.f32 %v785, %v789
    %v792 = vadd.f32 %v786, %v790
    %v793 = vrot.slane %v769, 4
    %v794 = vrot.slane %v772, 4
    %vm795 = vcmp.lt.s32.totalorder %v153, 4
    %v796 = vsel %vm795, %v793, %v794
    %v797 = vsel %vm795, %v794, %v793
    %v798 = vadd.f32 %v791, %v796
    %v799 = vadd.f32 %v792, %v797
    %v800 = vsel %vm795, 1, 0
    %vm801 = vcmp.eq.s32.totalorder %v800, 1
    %v802 = vsel %vm801, %v798, -inf
    %v803 = vsel %vm801, %v799, -inf
    %v804 = vrot.slane %v802, 4
    %v805 = vmax.f32 %v802, %v804
    %v806 = vrot.slane %v805, 2
    %v807 = vmax.f32 %v805, %v806
    %v808 = vrot.slane %v807, 1
    %v809 = vmax.f32 %v807, %v808
    %v810 = vrot.slane %v803, 4
    %v811 = vmax.f32 %v803, %v810
    %v812 = vrot.slane %v811, 2
    %v813 = vmax.f32 %v811, %v812
    %v814 = vrot.slane %v813, 1
    %v815 = vmax.f32 %v813, %v814
    %v817 = vlaneseq
    %v818 = vshrl.u32 %v817, 7
    %v819 = vsub.s32 0, %v818
    %v820 = vrot.slane %v621, %v819
    %v822 = vadd.f32 %v809, %v820
    %v823 = vadd.f32 %v815, %v820
    %v824 = vmax.f32 %v822, 0.0
    %v825 = vmax.f32 %v823, 0.0
    %v828 = vrot.slane %v825, 7
    %v829 = vsel %vm467, %v828, %v824
    %831 = vmatprep.subr.mxu0 0.0
    %832 = vmatpush1.msra.mxu0 %v136
    %833 = vmatprep.subr.mxu0 0.0
    %834 = vmatpush1.msra.mxu0 %v137
    %835 = vmatprep.subr.mxu0 0.0
    %836 = vmatpush1.msra.mxu0 %v138
    %837 = vmatprep.subr.mxu0 0.0
    %838 = vmatpush1.msra.mxu0 %v139
    %839 = vmatprep.subr.mxu0 0.0
    %840 = vmatpush1.msra.mxu0 %v140
    %841 = vmatprep.subr.mxu0 0.0
    %842 = vmatpush1.msra.mxu0 %v141
    %843 = vmatprep.subr.mxu0 0.0
    %844 = vmatpush1.msra.mxu0 %v142
    %845 = vmatprep.subr.mxu0 0.0
    %846 = vmatpush1.msra.mxu0 %v143
    %847 = vmatprep.subr.mxu0 0.0
    %848 = vmatpush1.msra.mxu0 %v144
    %849 = vmatprep.subr.mxu0 0.0
    %850 = vmatpush1.msra.mxu0 %v145
    %851 = vmatprep.subr.mxu0 0.0
    %852 = vmatpush1.msra.mxu0 %v146
    %853 = vmatprep.subr.mxu0 0.0
    %854 = vmatpush1.msra.mxu0 %v147
    %855 = vmatprep.subr.mxu0 0.0
    %856 = vmatpush1.msra.mxu0 %v148
    %857 = vmatprep.subr.mxu0 0.0
    %858 = vmatpush1.msra.mxu0 %v149
    %859 = vmatprep.subr.mxu0 0.0
    %860 = vmatpush1.msra.mxu0 %v150
    %861 = vmatprep.subr.mxu0 0.0
    %862 = vmatpush1.msra.mxu0 %v151
    %863 = vmatprep.subr.mxu0 0.0
    %864 = vmatpush1.msra.mxu0 0.0
    %865 = vmatprep.subr.mxu0 0.0
    %866 = vmatpush1.msra.mxu0 0.0
    %867 = vmatprep.subr.mxu0 0.0
    %868 = vmatpush1.msra.mxu0 0.0
    %869 = vmatprep.subr.mxu0 0.0
    %870 = vmatpush1.msra.mxu0 0.0
    %871 = vmatprep.subr.mxu0 0.0
    %872 = vmatpush1.msra.mxu0 0.0
    %873 = vmatprep.subr.mxu0 0.0
    %874 = vmatpush1.msra.mxu0 0.0
    %875 = vmatprep.subr.mxu0 0.0
    %876 = vmatpush1.msra.mxu0 0.0
    %877 = vmatprep.subr.mxu0 0.0
    %878 = vmatpush1.msra.mxu0 0.0
    %879 = vmatprep.subr.mxu0 0.0
    %880 = vmatpush1.msra.mxu0 0.0
    %881 = vmatprep.subr.mxu0 0.0
    %882 = vmatpush1.msra.mxu0 0.0
    %883 = vmatprep.subr.mxu0 0.0
    %884 = vmatpush1.msra.mxu0 0.0
    %885 = vmatprep.subr.mxu0 0.0
    %886 = vmatpush1.msra.mxu0 0.0
    %887 = vmatprep.subr.mxu0 0.0
    %888 = vmatpush1.msra.mxu0 0.0
    %889 = vmatprep.subr.mxu0 0.0
    %890 = vmatpush1.msra.mxu0 0.0
    %891 = vmatprep.subr.mxu0 0.0
    %892 = vmatpush1.msra.mxu0 0.0
    %893 = vmatprep.subr.mxu0 0.0
    %894 = vmatpush1.msra.mxu0 0.0
    %895 = vmatprep.mubr.f32.mxu0 0.0
    %896 = vmatmul.mubr.f32.gmra.mrb[0].mxu0 %v829
    %v897 = vpop.f32.mrb[0].mxu0
    %v898 = vadd.f32 0.0, %v897
    %v899 = vpop.f32.mrb[0].mxu0
    %900 = vdwg.mxu0
    %v901 = vadd.f32 %v612, %v898
    %v902 = vld [vmem:[%s8] sm:$0x1]
    %v904 = vlaneseq
    %v905 = vshrl.u32 %v904, 7
    %v906 = vsub.s32 0, %v905
    %v907 = vrot.slane %v902, %v906
    %v909 = vadd.f32 %v901, %v907
    %910 = vst [vmem:[#allocation11] sm:$0x3] %v909
    // Predicated region
    $region58: #{tpu_custom_call.1} parent=1 // pred_check
      _
    $region59: #{tpu_custom_call.1} parent=1 // pred_check_branch
      %912 = sbr.rel (0) target = $region61
    $region60: #{tpu_custom_call.1} parent=1 // pred_region
      %s914 = ssub.s32 32, 32
      %915 = vsyncadd [#allocation4], %s914
      %s917 = sshll.u32 [#allocation11], 4
      %s918 = int_to_ptr.vmem [resolvable:$true] %s917
      %920 = dma.vmem_to_hbm [thread:$0]  %s918, 32, %s9, [#allocation4]
    $region61: #{tpu_custom_call.1} parent=1 // pred_fallthru
      _
    // Predicated region
    $region62: #{tpu_custom_call.1} parent=1 // pred_check
      _
    $region63: #{tpu_custom_call.1} parent=1 // pred_check_branch
      %922 = sbr.rel (0) target = $region65
    $region64: #{tpu_custom_call.1} parent=1 // pred_region
      %923 = dma.done [#allocation4], 32
    $region65: #{tpu_custom_call.1} parent=1 // pred_fallthru
      _
    %924 = vsyncpa [#allocation3], 1
    %925 = vsyncpa [#allocation6], 1
    %926 = vsyncpa [#allocation9], 1
    %927 = vsyncpa [#allocation4], 1

</llo_original>
